<compile_context>
chip_gen: v7x
topology: tpu7x:2x2x1
jax: 0.10.0
libtpu: 0.0.40
codegen_flags: <defaults>
</compile_context>

<pallas_src>
import numpy as np
import jax
import jax.numpy as jnp
from jax import lax
from jax.experimental import pallas as pl
from jax.experimental.pallas import tpu as pltpu

BN_EPS = 1e-5
LANE = 128
NEG_INF = -1e30
VMEM_LIMIT = 48 * 1024 * 1024      # scoped limit; plan is kept well below (v7x-safe)
VMEM_BUDGET = 40 * 1024 * 1024     # target for the double-buffered plan estimate


def _round_up(x, m):
    return (x + m - 1) // m * m


def _largest_div_tile(n_pad, cap):
    for t in (2048, 1024, 512, 256, 128):
        if t <= cap and n_pad % t == 0:
            return t
    return LANE


def _agg_vmem_bytes(tm, tk, f_in_pad, f_out_pad):
    a_buf = 2 * tm * tk * 2                 # A tile, bf16, double-buffered
    x_buf = 2 * tk * f_in_pad * 2           # X tile, bf16
    w_buf = 2 * f_in_pad * f_out_pad * 2    # W', bf16
    b_buf = 2 * f_out_pad * 4               # bias, f32
    o_buf = 2 * tm * f_out_pad * 2          # out tile, bf16
    acc = tm * f_out_pad * 4                # accumulator, f32
    return a_buf + x_buf + w_buf + b_buf + o_buf + acc


def _pick_agg_tiles(n_pad, f_in_pad, f_out_pad):
    tm = _largest_div_tile(n_pad, 1024)
    # v7x megacore: keep >= 2 row blocks so both TensorCores are fed.
    if n_pad // tm < 2 and n_pad >= 2 * LANE:
        tm = _largest_div_tile(n_pad, max(LANE, tm // 2))
    tk = _largest_div_tile(n_pad, 2048)
    while _agg_vmem_bytes(tm, tk, f_in_pad, f_out_pad) > VMEM_BUDGET and tk > LANE:
        tk = _largest_div_tile(n_pad, tk // 2)
    while _agg_vmem_bytes(tm, tk, f_in_pad, f_out_pad) > VMEM_BUDGET and tm > LANE:
        tm = _largest_div_tile(n_pad, tm // 2)
    return tm, tk


# ---------------------------------------------------------------------------
# Host-side schedule for block-diagonal sparsity of the batched adjacency.
# Graphs occupy contiguous node ranges (standard PyG batching), so for row
# block i only a contiguous range of k blocks is nonzero.
# ---------------------------------------------------------------------------
def block_diag_schedule(batch, num_nodes, num_graphs, n_pad, tm, tk):
    batch_np = np.asarray(batch).astype(np.int64)
    counts = np.bincount(batch_np, minlength=num_graphs)
    ends = np.cumsum(counts)
    starts = ends - counts
    num_i = n_pad // tm
    klo = np.zeros(num_i, np.int64)
    khi = np.zeros(num_i, np.int64)
    for i in range(num_i):
        r0 = i * tm
        r1 = min((i + 1) * tm, num_nodes)
        if r0 >= num_nodes:
            continue                      # all-padded row block: zero rows of A
        g0 = int(batch_np[r0])
        g1 = int(batch_np[r1 - 1])
        c0 = int(starts[g0])
        c1 = int(ends[g1])
        klo[i] = c0 // tk
        khi[i] = (c1 - 1) // tk + 1
    cnt = (khi - klo).astype(np.int32)
    max_cnt = int(max(1, cnt.max()))
    kmap = np.zeros((num_i, max_cnt), np.int32)
    for i in range(num_i):
        c = int(cnt[i])
        if c > 0:
            kmap[i, :c] = np.arange(klo[i], khi[i], dtype=np.int32)
            kmap[i, c:] = khi[i] - 1      # revisit last valid block: no new DMA
    return jnp.asarray(kmap.reshape(-1)), jnp.asarray(cnt), max_cnt


# ---------------------------------------------------------------------------
# Kernel 1 (fused GCN layer):
#   OUT[i] = relu( sum_k A[i,k] @ (X[k] @ W') + b' )
#   grid = (row blocks, active k steps); scalar-prefetched kmap/kcnt drive the
#   data-dependent index maps so all-zero A tiles are never DMA'd or multiplied.
# ---------------------------------------------------------------------------
def _fused_gcn_kernel(kmap_ref, kcnt_ref, a_ref, x_ref, w_ref, b_ref, o_ref, acc_ref):
    i = pl.program_id(0)
    j = pl.program_id(1)

    @pl.when(j == 0)
    def _():
        acc_ref[...] = jnp.zeros_like(acc_ref)

    @pl.when(j < kcnt_ref[i])
    def _():
        ht = jnp.dot(x_ref[...], w_ref[...],
                     preferred_element_type=jnp.float32).astype(jnp.bfloat16)
        acc_ref[...] += jnp.dot(a_ref[...], ht,
                                preferred_element_type=jnp.float32)

    @pl.when(j == pl.num_programs(1) - 1)
    def _():
        o_ref[...] = jnp.maximum(acc_ref[...] + b_ref[...], 0.0).astype(o_ref.dtype)


def fused_gcn_layer(a_bf16, x_bf16, w_bf16, b_fused, kmap, kcnt, max_cnt, *, tm, tk):
    n_pad = a_bf16.shape[0]
    f_in = x_bf16.shape[1]
    f_out = w_bf16.shape[1]
    return pl.pallas_call(
        _fused_gcn_kernel,
        out_shape=jax.ShapeDtypeStruct((n_pad, f_out), jnp.bfloat16),
        grid_spec=pltpu.PrefetchScalarGridSpec(
            num_scalar_prefetch=2,
            grid=(n_pad // tm, max_cnt),
            in_specs=[
                pl.BlockSpec((tm, tk),
                             lambda i, j, km, kc: (i, km[i * max_cnt + j])),
                pl.BlockSpec((tk, f_in),
                             lambda i, j, km, kc: (km[i * max_cnt + j], 0)),
                pl.BlockSpec((f_in, f_out), lambda i, j, km, kc: (0, 0)),
                pl.BlockSpec((1, f_out), lambda i, j, km, kc: (0, 0)),
            ],
            out_specs=pl.BlockSpec((tm, f_out), lambda i, j, km, kc: (i, 0)),
            scratch_shapes=[pltpu.VMEM((tm, f_out), jnp.float32)]),
        compiler_params=pltpu.CompilerParams(
            dimension_semantics=("parallel", "arbitrary"),
            vmem_limit_bytes=VMEM_LIMIT),
    )(kmap, kcnt, a_bf16, x_bf16, w_bf16, b_fused)


# ---------------------------------------------------------------------------
# Kernel 2: fused global_mean_pool + Linear classifier + log_softmax
#   streams H in node blocks (bf16 x bf16 pooled accumulation), finalizes the
#   tiny (B, C_pad) classifier on a 128-lane padded logits tile.
# ---------------------------------------------------------------------------
def _pool_cls_kernel(p_ref, h_ref, wc_ref, bc_ref, o_ref, acc_ref):
    k = pl.program_id(0)

    @pl.when(k == 0)
    def _():
        acc_ref[...] = jnp.zeros_like(acc_ref)

    acc_ref[...] += jnp.dot(p_ref[...], h_ref[...],
                            preferred_element_type=jnp.float32)

    @pl.when(k == pl.num_programs(0) - 1)
    def _():
        logits = jnp.dot(acc_ref[...], wc_ref[...],
                         preferred_element_type=jnp.float32) + bc_ref[...]
        m = jnp.max(logits, axis=1, keepdims=True)
        z = logits - m
        lse = jnp.log(jnp.sum(jnp.exp(z), axis=1, keepdims=True))
        o_ref[...] = z - lse


def pool_classify(pool_bf16, h_bf16, wc_pad, bc_pad, *, tk):
    b, n_pad = pool_bf16.shape
    h_pad = h_bf16.shape[1]
    c_pad = wc_pad.shape[1]
    return pl.pallas_call(
        _pool_cls_kernel,
        out_shape=jax.ShapeDtypeStruct((b, c_pad), jnp.float32),
        grid_spec=pltpu.PrefetchScalarGridSpec(
            num_scalar_prefetch=0,
            grid=(n_pad // tk,),
            in_specs=[pl.BlockSpec((b, tk), lambda k: (0, k)),
                      pl.BlockSpec((tk, h_pad), lambda k: (k, 0)),
                      pl.BlockSpec((h_pad, c_pad), lambda k: (0, 0)),
                      pl.BlockSpec((1, c_pad), lambda k: (0, 0))],
            out_specs=pl.BlockSpec((b, c_pad), lambda k: (0, 0)),
            scratch_shapes=[pltpu.VMEM((b, h_pad), jnp.float32)]),
        compiler_params=pltpu.CompilerParams(
            dimension_semantics=("arbitrary",),
            vmem_limit_bytes=VMEM_LIMIT),
    )(pool_bf16, h_bf16, wc_pad, bc_pad)
    # TODO(synk): the final layer's aggregation epilogue could accumulate the pooled
    # embedding directly, saving this last full read of H from HBM.


# ---------------------------------------------------------------------------
# Plain-JAX glue: graph preprocessing, BN folding, padding, parameter init
# ---------------------------------------------------------------------------
def gcn_norm_dense(edge_index, edge_weight, num_nodes, n_pad):
    """Dense D^-1/2 (A + I) D^-1/2, built directly at padded size, cast to bf16."""
    src, dst = edge_index[0], edge_index[1]
    if edge_weight is None:
        edge_weight = jnp.ones(src.shape, jnp.float32)
    a = jnp.zeros((n_pad, n_pad), jnp.float32).at[dst, src].add(edge_weight)
    diag = (jnp.arange(n_pad) < num_nodes).astype(jnp.float32)   # self-loops (weight 1)
    a = a + jnp.diag(diag)
    deg = jnp.sum(a, axis=1)
    d_inv_sqrt = jnp.where(deg > 0, lax.rsqrt(deg), 0.0)
    a = d_inv_sqrt[:, None] * a * d_inv_sqrt[None, :]
    return a.astype(jnp.bfloat16)


def mean_pool_matrix(batch, num_nodes, num_graphs, n_pad):
    node_graph = jnp.full((n_pad,), -1, jnp.int32).at[:num_nodes].set(batch.astype(jnp.int32))
    onehot = (node_graph[None, :] == jnp.arange(num_graphs, dtype=jnp.int32)[:, None])
    onehot = onehot.astype(jnp.float32)
    counts = jnp.sum(onehot, axis=1, keepdims=True)
    p = onehot / jnp.maximum(counts, 1.0)
    return p.astype(jnp.bfloat16)


def _fold_and_pad_layer(w, b, bn, f_in_pad, f_out_pad):
    """Fold eval-mode BatchNorm + conv bias into (W', b'), zero-pad to lane width."""
    scale = bn["gamma"] * lax.rsqrt(bn["var"] + BN_EPS)          # (1, f_out)
    w_f = w * scale                                              # (f_in, f_out)
    b_f = (b - bn["mean"]) * scale + bn["beta"]                  # (1, f_out)
    f_in, f_out = w.shape
    w_pad = jnp.zeros((f_in_pad, f_out_pad), jnp.float32).at[:f_in, :f_out].set(w_f)
    b_pad = jnp.zeros((1, f_out_pad), jnp.float32).at[:, :f_out].set(b_f)
    return w_pad.astype(jnp.bfloat16), b_pad


def _pad_classifier(wc, bc, f_in_pad, c_pad):
    f_in, c = wc.shape
    wc_pad = jnp.zeros((f_in_pad, c_pad), jnp.float32).at[:f_in, :c].set(wc)
    # Padded classes get a huge negative bias so log_softmax ignores them.
    bc_pad = jnp.full((1, c_pad), NEG_INF, jnp.float32).at[:, :c].set(bc)
    return wc_pad, bc_pad


def kaiming_uniform(key, fan_in, shape):
    bound = jnp.sqrt(6.0 / fan_in)
    return jax.random.uniform(key, shape, jnp.float32, -bound, bound)


def init_params(key, input_size, hidden_size, num_hidden_layers, num_classes):
    keys = jax.random.split(key, num_hidden_layers + 1)
    gcn = []
    fin = input_size
    for i in range(num_hidden_layers):
        w = kaiming_uniform(keys[i], fin, (fin, hidden_size))
        b = jnp.zeros((1, hidden_size), jnp.float32)
        gcn.append((w, b))
        fin = hidden_size
    wc = kaiming_uniform(keys[-1], hidden_size, (hidden_size, num_classes))
    bc = jnp.zeros((1, num_classes), jnp.float32)
    # Shared BatchNorm1d (same instance reused in the PyTorch module), eval stats.
    bn = dict(gamma=jnp.ones((1, hidden_size), jnp.float32),
              beta=jnp.zeros((1, hidden_size), jnp.float32),
              mean=jnp.zeros((1, hidden_size), jnp.float32),
              var=jnp.ones((1, hidden_size), jnp.float32))
    return dict(gcn=gcn, wc=wc, bc=bc, bn=bn)
    # TODO(synk): LayerNorm branch (use_batch_norm=False) not implemented.


def gnn_forward(params, x, edge_index, edge_weight, batch, num_graphs):
    num_nodes, f_in = x.shape
    hidden = params["gcn"][0][0].shape[1]
    num_classes = params["wc"].shape[1]

    n_pad = _round_up(num_nodes, LANE)
    f_in_pad = _round_up(f_in, LANE)
    h_pad = _round_up(hidden, LANE)
    c_pad = _round_up(num_classes, LANE)

    tm, tk = _pick_agg_tiles(n_pad, max(f_in_pad, h_pad), h_pad)
    kmap, kcnt, max_cnt = block_diag_schedule(batch, num_nodes, num_graphs, n_pad, tm, tk)

    a_norm = gcn_norm_dense(edge_index, edge_weight, num_nodes, n_pad)       # bf16
    pool = mean_pool_matrix(batch, num_nodes, num_graphs, n_pad)             # bf16

    bn = params["bn"]
    h = jnp.zeros((n_pad, f_in_pad), jnp.bfloat16)
    h = h.at[:num_nodes, :f_in].set(x.astype(jnp.bfloat16))
    cur_in_pad = f_in_pad
    for (w, b) in params["gcn"]:
        w_p, b_p = _fold_and_pad_layer(w, b, bn, cur_in_pad, h_pad)
        # relu(A_norm @ (h @ W') + b') in one fused, block-sparse kernel.
        h = fused_gcn_layer(a_norm, h, w_p, b_p, kmap, kcnt, max_cnt, tm=tm, tk=tk)
        cur_in_pad = h_pad
        # TODO(synk): Dropout is stochastic in training mode; eval-mode identity used.

    wc_p, bc_p = _pad_classifier(params["wc"], params["bc"], h_pad, c_pad)
    out_pad = pool_classify(pool, h, wc_p, bc_p, tk=tk)                      # (B, c_pad)
    return out_pad[:, :num_classes]


# Plain-JAX f32 reference (for a loose numerical sanity check).
def gnn_reference(params, x, edge_index, edge_weight, batch, num_graphs):
    num_nodes = x.shape[0]
    a = jnp.zeros((num_nodes, num_nodes), jnp.float32)
    a = a.at[edge_index[1], edge_index[0]].add(edge_weight)
    a = a + jnp.eye(num_nodes, dtype=jnp.float32)
    deg = a.sum(1)
    dis = jnp.where(deg > 0, lax.rsqrt(deg), 0.0)
    a = dis[:, None] * a * dis[None, :]
    bn = params["bn"]
    h = x
    for (w, b) in params["gcn"]:
        h = a @ (h @ w) + b
        h = (h - bn["mean"]) / jnp.sqrt(bn["var"] + BN_EPS) * bn["gamma"] + bn["beta"]
        h = jnp.maximum(h, 0.0)
    onehot = (batch[None, :] == jnp.arange(num_graphs)[:, None]).astype(jnp.float32)
    pooled = (onehot @ h) / jnp.maximum(onehot.sum(1, keepdims=True), 1.0)
    logits = pooled @ params["wc"] + params["bc"]
    return jax.nn.log_softmax(logits, axis=1)


# ---------------------------------------------------------------------------
if __name__ == "__main__":
    key = jax.random.PRNGKey(0)

    # Small problem: 2 graphs of 8 nodes each, 8 input features, hidden 32,
    # 2 GCN layers, 4 classes.
    num_nodes, input_size, hidden_size = 16, 8, 32
    num_hidden_layers, num_classes, num_graphs = 2, 4, 2
    num_edges = 40

    k_x, k_e, k_w, k_p = jax.random.split(key, 4)
    x = jax.random.normal(k_x, (num_nodes, input_size), jnp.float32)
    # Random edges kept inside each graph's node block.
    e_src = jax.random.randint(k_e, (num_edges,), 0, 8)
    e_dst = jax.random.randint(jax.random.fold_in(k_e, 1), (num_edges,), 0, 8)
    graph_of_edge = (jnp.arange(num_edges) % 2) * 8
    edge_index = jnp.stack([e_src + graph_of_edge, e_dst + graph_of_edge], axis=0)
    edge_weight = jax.random.uniform(k_w, (num_edges,), jnp.float32, 0.5, 1.5)
    batch = jnp.concatenate([jnp.zeros(8, jnp.int32), jnp.ones(8, jnp.int32)])

    params = init_params(k_p, input_size, hidden_size, num_hidden_layers, num_classes)

    out = gnn_forward(params, x, edge_index, edge_weight, batch, num_graphs)
    out = jax.block_until_ready(out)
    assert out.shape == (num_graphs, num_classes)
    assert bool(jnp.all(jnp.isfinite(out)))
    # log_softmax rows must (approximately) exponentiate-sum to 1.
    assert bool(jnp.all(jnp.abs(jnp.sum(jnp.exp(out), axis=1) - 1.0) < 1e-3))
    # Loose check vs. f32 reference (bf16 operands => generous tolerance).
    ref = gnn_reference(params, x, edge_index, edge_weight, batch, num_graphs)
    assert float(jnp.max(jnp.abs(out - ref))) < 0.3
    print("KERNEL_OK")
</pallas_src>

<mosaic_0001>
module attributes {stable_mosaic.version = 11 : i64} {
  func.func @_fused_gcn_kernel(%arg0: i32, %arg1: i32, %arg2: memref<1xi32, #tpu.memory_space<smem>>, %arg3: memref<1xi32, #tpu.memory_space<smem>>, %arg4: memref<128x128xbf16, #tpu.memory_space<vmem>>, %arg5: memref<128x128xbf16, #tpu.memory_space<vmem>>, %arg6: memref<128x128xbf16, #tpu.memory_space<vmem>>, %arg7: memref<1x128xf32, #tpu.memory_space<vmem>>, %arg8: memref<128x128xbf16, #tpu.memory_space<vmem>>, %arg9: memref<128x128xf32, #tpu.memory_space<vmem>>) attributes {dimension_semantics = [#tpu.dimension_semantics<parallel>, #tpu.dimension_semantics<arbitrary>], iteration_bounds = array<i64: 1, 1>, scalar_prefetch = 2 : i64, scratch_operands = 1 : i64, tpu.core_type = #tpu.core_type<tc>, window_params = [{transform_indices = @transform_0, window_bounds = array<i64: 128, 128>}, {transform_indices = @transform_1, window_bounds = array<i64: 128, 128>}, {pipeline_mode = #tpu.pipeline_mode<synchronous>, transform_indices = @transform_2, window_bounds = array<i64: 128, 128>}, {pipeline_mode = #tpu.pipeline_mode<synchronous>, transform_indices = @transform_3, window_bounds = array<i64: 1, 128>}, {transform_indices = @transform_4, window_bounds = array<i64: 128, 128>}]} {
    %c0_i32 = arith.constant 0 : i32
    %0 = arith.cmpi eq, %arg1, %c0_i32 : i32
    %1 = arith.extui %0 : i1 to i32
    %c0_i32_0 = arith.constant 0 : i32
    %2 = arith.cmpi ne, %1, %c0_i32_0 : i32
    scf.if %2 {
      %cst = arith.constant 0.000000e+00 : f32
      %11 = vector.broadcast %cst : f32 to vector<128x128xf32>
      %c0 = arith.constant 0 : index
      %c0_4 = arith.constant 0 : index
      %12 = vector.load %arg9[%c0, %c0_4] : memref<128x128xf32, #tpu.memory_space<vmem>>, vector<128x128xf32>
      tpu.vector_store %arg9[%c0, %c0_4], %11 {strides = array<i32>} : memref<128x128xf32, #tpu.memory_space<vmem>>, vector<128x128xf32>,
    } else {
    }
    %3 = arith.index_cast %arg0 : i32 to index
    %4 = memref.load %arg3[%3] : memref<1xi32, #tpu.memory_space<smem>>
    %5 = arith.cmpi slt, %arg1, %4 : i32
    %6 = arith.extui %5 : i1 to i32
    %c0_i32_1 = arith.constant 0 : i32
    %7 = arith.cmpi ne, %6, %c0_i32_1 : i32
    scf.if %7 {
      %c0 = arith.constant 0 : index
      %c0_4 = arith.constant 0 : index
      %11 = vector.load %arg5[%c0, %c0_4] : memref<128x128xbf16, #tpu.memory_space<vmem>>, vector<128x128xbf16>
      %c0_5 = arith.constant 0 : index
      %c0_6 = arith.constant 0 : index
      %12 = vector.load %arg6[%c0_5, %c0_6] : memref<128x128xbf16, #tpu.memory_space<vmem>>, vector<128x128xbf16>
      %cst = arith.constant dense<0.000000e+00> : vector<128x128xf32>
      %13 = tpu.matmul %11, %12, %cst {dimension_numbers = #tpu.dot_dimension_numbers<[1], [0], [0], [1], [0, 0, 1, 1], [], []>} : vector<128x128xbf16>, vector<128x128xbf16>, vector<128x128xf32> -> vector<128x128xf32>
      %14 = arith.truncf %13 : vector<128x128xf32> to vector<128x128xbf16>
      %c0_7 = arith.constant 0 : index
      %c0_8 = arith.constant 0 : index
      %15 = vector.load %arg9[%c0_7, %c0_8] : memref<128x128xf32, #tpu.memory_space<vmem>>, vector<128x128xf32>
      %c0_9 = arith.constant 0 : index
      %c0_10 = arith.constant 0 : index
      %16 = vector.load %arg4[%c0_9, %c0_10] : memref<128x128xbf16, #tpu.memory_space<vmem>>, vector<128x128xbf16>
      %cst_11 = arith.constant dense<0.000000e+00> : vector<128x128xf32>
      %17 = tpu.matmul %16, %14, %cst_11 {dimension_numbers = #tpu.dot_dimension_numbers<[1], [0], [0], [1], [0, 0, 1, 1], [], []>} : vector<128x128xbf16>, vector<128x128xbf16>, vector<128x128xf32> -> vector<128x128xf32>
      %18 = arith.addf %15, %17 : vector<128x128xf32>
      %c0_12 = arith.constant 0 : index
      %c0_13 = arith.constant 0 : index
      %19 = vector.load %arg9[%c0_12, %c0_13] : memref<128x128xf32, #tpu.memory_space<vmem>>, vector<128x128xf32>
      tpu.vector_store %arg9[%c0_12, %c0_13], %18 {strides = array<i32>} : memref<128x128xf32, #tpu.memory_space<vmem>>, vector<128x128xf32>,
    } else {
    }
    %c0_i32_2 = arith.constant 0 : i32
    %8 = arith.cmpi eq, %arg1, %c0_i32_2 : i32
    %9 = arith.extui %8 : i1 to i32
    %c0_i32_3 = arith.constant 0 : i32
    %10 = arith.cmpi ne, %9, %c0_i32_3 : i32
    scf.if %10 {
      %c0 = arith.constant 0 : index
      %c0_4 = arith.constant 0 : index
      %11 = vector.load %arg9[%c0, %c0_4] : memref<128x128xf32, #tpu.memory_space<vmem>>, vector<128x128xf32>
      %c0_5 = arith.constant 0 : index
      %c0_6 = arith.constant 0 : index
      %12 = vector.load %arg7[%c0_5, %c0_6] : memref<1x128xf32, #tpu.memory_space<vmem>>, vector<1x128xf32>
      %13 = vector.broadcast %12 : vector<1x128xf32> to vector<128x128xf32>
      %14 = arith.addf %11, %13 : vector<128x128xf32>
      %cst = arith.constant 0.000000e+00 : f32
      %15 = vector.broadcast %cst : f32 to vector<128x128xf32>
      %16 = arith.maximumf %14, %15 : vector<128x128xf32>
      %17 = arith.truncf %16 : vector<128x128xf32> to vector<128x128xbf16>
      %c0_7 = arith.constant 0 : index
      %c0_8 = arith.constant 0 : index
      %18 = vector.load %arg8[%c0_7, %c0_8] : memref<128x128xbf16, #tpu.memory_space<vmem>>, vector<128x128xbf16>
      tpu.vector_store %arg8[%c0_7, %c0_8], %17 {strides = array<i32>} : memref<128x128xbf16, #tpu.memory_space<vmem>>, vector<128x128xbf16>,
    } else {
    }
    return
  }
  func.func @transform_0(%arg0: i32, %arg1: i32, %arg2: memref<1xi32, #tpu.memory_space<smem>>, %arg3: memref<1xi32, #tpu.memory_space<smem>>) -> (i32, i32) {
    %c1_i32 = arith.constant 1 : i32
    %0 = arith.muli %arg0, %c1_i32 : i32
    %1 = arith.addi %0, %arg1 : i32
    %2 = arith.index_cast %1 : i32 to index
    %3 = memref.load %arg2[%2] : memref<1xi32, #tpu.memory_space<smem>>
    %c0_i32 = arith.constant 0 : i32
    return %arg0, %3 : i32, i32
  }
  func.func @transform_1(%arg0: i32, %arg1: i32, %arg2: memref<1xi32, #tpu.memory_space<smem>>, %arg3: memref<1xi32, #tpu.memory_space<smem>>) -> (i32, i32) {
    %c1_i32 = arith.constant 1 : i32
    %0 = arith.muli %arg0, %c1_i32 : i32
    %1 = arith.addi %0, %arg1 : i32
    %2 = arith.index_cast %1 : i32 to index
    %3 = memref.load %arg2[%2] : memref<1xi32, #tpu.memory_space<smem>>
    %c0_i32 = arith.constant 0 : i32
    %c0_i32_0 = arith.constant 0 : i32
    return %3, %c0_i32 : i32, i32
  }
  func.func @transform_2(%arg0: i32, %arg1: i32, %arg2: memref<1xi32, #tpu.memory_space<smem>>, %arg3: memref<1xi32, #tpu.memory_space<smem>>) -> (i32, i32) {
    %c0_i32 = arith.constant 0 : i32
    %c0_i32_0 = arith.constant 0 : i32
    %c0_i32_1 = arith.constant 0 : i32
    return %c0_i32, %c0_i32_0 : i32, i32
  }
  func.func @transform_3(%arg0: i32, %arg1: i32, %arg2: memref<1xi32, #tpu.memory_space<smem>>, %arg3: memref<1xi32, #tpu.memory_space<smem>>) -> (i32, i32) {
    %c0_i32 = arith.constant 0 : i32
    %c0_i32_0 = arith.constant 0 : i32
    %c0_i32_1 = arith.constant 0 : i32
    return %c0_i32, %c0_i32_0 : i32, i32
  }
  func.func @transform_4(%arg0: i32, %arg1: i32, %arg2: memref<1xi32, #tpu.memory_space<smem>>, %arg3: memref<1xi32, #tpu.memory_space<smem>>) -> (i32, i32) {
    %c0_i32 = arith.constant 0 : i32
    %c0_i32_0 = arith.constant 0 : i32
    return %arg0, %c0_i32 : i32, i32
  }
}

</mosaic_0001>

<llo_original>
// kernel: tpu_custom_call.1
$region0: #{tpu_custom_call.1}
  #allocation0 [shape = 'u32[]', space=smem, size = 0x4, offset = 0x4, fixed_abs, tag = 'smem constant byte address 0x4 - core index']
  #allocation1 [shape = 'u32[144,128]{1,0:T(1,128)}', space=vmem, size = 0x12000, scoped, tag = 'internal scratch']
  #allocation2 [shape = 'f32[128,128]{1,0:T(8,128)}', space=vmem, size = 0x10000, scoped, tag = 'scratch operand']
  #allocation3 [shape = 's32[1]{0}', space=sflag, size = 0x4, scoped, tag = 'scoped memory for tpu_custom_call.1']
  #allocation4 [shape = 's32[1]{0:T(128)S(6)}', space=smem, size = 0x200, scoped, tag = 'prefetched SMEM operand 0']
  #allocation5 [shape = 's32[1]{0:T(128)S(6)}', space=smem, size = 0x200, scoped, tag = 'prefetched SMEM operand 1']
  %s0 = inlined_call_operand.<no memory space> [shape: s32[1], index: 0, kind: input, shape index: {}]
  %s1 = inlined_call_operand.<no memory space> [shape: s32[1], index: 1, kind: input, shape index: {}]
  %s2 = inlined_call_operand.hbm [shape: bf16[128,128], index: 2, kind: input, shape index: {}]
  %s3 = inlined_call_operand.hbm [shape: bf16[128,128], index: 3, kind: input, shape index: {}]
  %s4 = inlined_call_operand.hbm [shape: bf16[128,128], index: 4, kind: input, shape index: {}]
  %s5 = inlined_call_operand.vmem [shape: f32[1,128], index: 5, kind: input, shape index: {}]
  %s6 = inlined_call_operand.hbm [shape: bf16[128,128], index: 6, kind: output, shape index: {}]
  %s7 = sld [smem:[#allocation0]]
  $region50: #{tpu_custom_call.1} parent=0
    _
  %s9 = ssub.s32 1, %s7
  %s10 = scalar_select 0, %s9, %s7
  %11 = sst [smem:[#allocation4]] %s0
  %12 = sst [smem:[#allocation5]] %s1
  $region1: #{tpu_custom_call.1} parent=0
    #allocation6 [shape = 'u8[32768]{0}', space=vmem, size = 0x8000, scoped, tag = 'input window, operand 2, single buffered']
    #allocation7 [shape = 's32[1]{0}', space=sflag, size = 0x4, scoped, tag = 'scoped memory for tpu_custom_call.1']
    #allocation8 [shape = 's32[1]{0}', space=sflag, size = 0x4, scoped, tag = 'scoped memory for tpu_custom_call.1']
    #allocation9 [shape = 'u8[32768]{0}', space=vmem, size = 0x8000, scoped, tag = 'input window, operand 3, single buffered']
    #allocation10 [shape = 's32[1]{0}', space=sflag, size = 0x4, scoped, tag = 'scoped memory for tpu_custom_call.1']
    #allocation11 [shape = 'u8[32768]{0}', space=vmem, size = 0x8000, scoped, tag = 'input window, operand 4, single buffered']
    #allocation12 [shape = 'u8[32768]{0}', space=vmem, size = 0x8000, scoped, tag = 'output window, operand 0, single buffered']
    %13 = vsyncpa [#allocation7], 0
    %14 = vsyncpa [#allocation10], 0
    %15 = vsyncpa [#allocation8], 0
    // Predicated region
    $region2: #{tpu_custom_call.1} parent=1 // pred_check
      _
    $region3: #{tpu_custom_call.1} parent=1 // pred_check_branch
      %17 = sbr.rel (0) target = $region5
    $region4: #{tpu_custom_call.1} parent=1 // pred_region
      %s18 = sadd.s32 0, 0
      %s19 = sld [smem:[#allocation4 + %s18]]
      %s21 = ssub.s32 1024, 1024
      %22 = vsyncadd [#allocation7], %s21
      %s23 = smul.addr %s19, 64
      %s24 = scalar_lea.hbm %s2, %s23
      %s25 = sshll.u32 [#allocation6], 4
      %s26 = int_to_ptr.vmem [resolvable:$true] %s25
      %31 = dma.hbm_to_vmem [thread:$0]  %s24, 1024, %s26, [#allocation7], 64, 64, 4
    $region5: #{tpu_custom_call.1} parent=1 // pred_fallthru
      _
    // Predicated region
    $region6: #{tpu_custom_call.1} parent=1 // pred_check
      _
    $region7: #{tpu_custom_call.1} parent=1 // pred_check_branch
      %33 = sbr.rel (0) target = $region9
    $region8: #{tpu_custom_call.1} parent=1 // pred_region
      %s34 = sadd.s32 0, 0
      %s35 = sld [smem:[#allocation4 + %s34]]
      %s36 = smul.u32 16, %s35
      %s38 = ssub.s32 1024, 1024
      %39 = vsyncadd [#allocation10], %s38
      %s40 = smul.addr %s36, 64
      %s41 = scalar_lea.hbm %s3, %s40
      %s42 = sshll.u32 [#allocation9], 4
      %s43 = int_to_ptr.vmem [resolvable:$true] %s42
      %48 = dma.hbm_to_vmem [thread:$0]  %s41, 1024, %s43, [#allocation10], 64, 64, 4
    $region9: #{tpu_custom_call.1} parent=1 // pred_fallthru
      _
    // Predicated region
    $region10: #{tpu_custom_call.1} parent=1 // pred_check
      _
    $region11: #{tpu_custom_call.1} parent=1 // pred_check_branch
      %50 = sbr.rel (0) target = $region13
    $region12: #{tpu_custom_call.1} parent=1 // pred_region
      %s52 = ssub.s32 1024, 1024
      %53 = vsyncadd [#allocation10], %s52
      %s54 = sshll.u32 [#allocation11], 4
      %s55 = int_to_ptr.vmem [resolvable:$true] %s54
      %60 = dma.hbm_to_vmem [thread:$0]  %s4, 1024, %s55, [#allocation10], 64, 64, 4
    $region13: #{tpu_custom_call.1} parent=1 // pred_fallthru
      _
    // Predicated region
    $region14: #{tpu_custom_call.1} parent=1 // pred_check
      _
    $region15: #{tpu_custom_call.1} parent=1 // pred_check_branch
      %62 = sbr.rel (0) target = $region17
    $region16: #{tpu_custom_call.1} parent=1 // pred_region
      _
    $region17: #{tpu_custom_call.1} parent=1 // pred_fallthru
      _
    // Predicated region
    $region18: #{tpu_custom_call.1} parent=1 // pred_check
      _
    $region19: #{tpu_custom_call.1} parent=1 // pred_check_branch
      %64 = sbr.rel (0) target = $region21
    $region20: #{tpu_custom_call.1} parent=1 // pred_region
      %65 = dma.done [#allocation7], 1024
    $region21: #{tpu_custom_call.1} parent=1 // pred_fallthru
      _
    // Predicated region
    $region22: #{tpu_custom_call.1} parent=1 // pred_check
      _
    $region23: #{tpu_custom_call.1} parent=1 // pred_check_branch
      %67 = sbr.rel (0) target = $region25
    $region24: #{tpu_custom_call.1} parent=1 // pred_region
      %68 = dma.done [#allocation10], 1024
    $region25: #{tpu_custom_call.1} parent=1 // pred_fallthru
      _
    // Predicated region
    $region26: #{tpu_custom_call.1} parent=1 // pred_check
      _
    $region27: #{tpu_custom_call.1} parent=1 // pred_check_branch
      %70 = sbr.rel (0) target = $region29
    $region28: #{tpu_custom_call.1} parent=1 // pred_region
      %71 = dma.done [#allocation10], 1024
    $region29: #{tpu_custom_call.1} parent=1 // pred_fallthru
      _
    %s72 = sadd.s32 0, 0
    %s73 = sld [smem:[#allocation4 + %s72]]
    %s74 = sadd.s32 0, 0
    %s75 = sld [smem:[#allocation4 + %s74]]
    %s76 = smul.u32 16, %s75
    %p78 = scmp.eq.s32.totalorder 0, 0
    // Predicated region
    $region30: #{tpu_custom_call.1} parent=1 // pred_check
      %p79 = pneg %p78
    $region31: #{tpu_custom_call.1} parent=1 // pred_check_branch
      %81 = sbr.rel (%p79) target = $region33
    $region32: #{tpu_custom_call.1} parent=1 // pred_region
      %82 = vst [vmem:[#allocation2] sm:$0xff] 0.0
      %83 = vst [vmem:[#allocation2 + $0x8] sm:$0xff] 0.0
      %84 = vst [vmem:[#allocation2 + $0x10] sm:$0xff] 0.0
      %85 = vst [vmem:[#allocation2 + $0x18] sm:$0xff] 0.0
      %86 = vst [vmem:[#allocation2 + $0x20] sm:$0xff] 0.0
      %87 = vst [vmem:[#allocation2 + $0x28] sm:$0xff] 0.0
      %88 = vst [vmem:[#allocation2 + $0x30] sm:$0xff] 0.0
      %89 = vst [vmem:[#allocation2 + $0x38] sm:$0xff] 0.0
      %90 = vst [vmem:[#allocation2 + $0x40] sm:$0xff] 0.0
      %91 = vst [vmem:[#allocation2 + $0x48] sm:$0xff] 0.0
      %92 = vst [vmem:[#allocation2 + $0x50] sm:$0xff] 0.0
      %93 = vst [vmem:[#allocation2 + $0x58] sm:$0xff] 0.0
      %94 = vst [vmem:[#allocation2 + $0x60] sm:$0xff] 0.0
      %95 = vst [vmem:[#allocation2 + $0x68] sm:$0xff] 0.0
      %96 = vst [vmem:[#allocation2 + $0x70] sm:$0xff] 0.0
      %97 = vst [vmem:[#allocation2 + $0x78] sm:$0xff] 0.0
    $region33: #{tpu_custom_call.1} parent=1 // pred_fallthru
      _
    %s98 = sld [smem:[#allocation5]]
    %p99 = scmp.lt.s32.totalorder 0, %s98
    // Predicated region
    $region34: #{tpu_custom_call.1} parent=1 // pred_check
      %p100 = pneg %p99
    $region35: #{tpu_custom_call.1} parent=1 // pred_check_branch
      %102 = sbr.rel (%p100) target = $region37
    $region36: #{tpu_custom_call.1} parent=1 // pred_region
      %v103 = vld [vmem:[#allocation9] sm:$0xf]
      %v104 = vld [vmem:[#allocation9 + $0x4] sm:$0xf]
      %v105 = vld [vmem:[#allocation9 + $0x8] sm:$0xf]
      %v106 = vld [vmem:[#allocation9 + $0xc] sm:$0xf]
      %v107 = vld [vmem:[#allocation9 + $0x10] sm:$0xf]
      %v108 = vld [vmem:[#allocation9 + $0x14] sm:$0xf]
      %v109 = vld [vmem:[#allocation9 + $0x18] sm:$0xf]
      %v110 = vld [vmem:[#allocation9 + $0x1c] sm:$0xf]
      %v111 = vld [vmem:[#allocation9 + $0x20] sm:$0xf]
      %v112 = vld [vmem:[#allocation9 + $0x24] sm:$0xf]
      %v113 = vld [vmem:[#allocation9 + $0x28] sm:$0xf]
      %v114 = vld [vmem:[#allocation9 + $0x2c] sm:$0xf]
      %v115 = vld [vmem:[#allocation9 + $0x30] sm:$0xf]
      %v116 = vld [vmem:[#allocation9 + $0x34] sm:$0xf]
      %v117 = vld [vmem:[#allocation9 + $0x38] sm:$0xf]
      %v118 = vld [vmem:[#allocation9 + $0x3c] sm:$0xf]
      %v119 = vld [vmem:[#allocation11] sm:$0xf]
      %v120 = vld [vmem:[#allocation11 + $0x4] sm:$0xf]
      %v121 = vld [vmem:[#allocation11 + $0x8] sm:$0xf]
      %v122 = vld [vmem:[#allocation11 + $0xc] sm:$0xf]
      %v123 = vld [vmem:[#allocation11 + $0x10] sm:$0xf]
      %v124 = vld [vmem:[#allocation11 + $0x14] sm:$0xf]
      %v125 = vld [vmem:[#allocation11 + $0x18] sm:$0xf]
      %v126 = vld [vmem:[#allocation11 + $0x1c] sm:$0xf]
      %v127 = vld [vmem:[#allocation11 + $0x20] sm:$0xf]
      %v128 = vld [vmem:[#allocation11 + $0x24] sm:$0xf]
      %v129 = vld [vmem:[#allocation11 + $0x28] sm:$0xf]
      %v130 = vld [vmem:[#allocation11 + $0x2c] sm:$0xf]
      %v131 = vld [vmem:[#allocation11 + $0x30] sm:$0xf]
      %v132 = vld [vmem:[#allocation11 + $0x34] sm:$0xf]
      %v133 = vld [vmem:[#allocation11 + $0x38] sm:$0xf]
      %v134 = vld [vmem:[#allocation11 + $0x3c] sm:$0xf]
      %v151 = vunpack.c.l.b16 %v103
      %v152 = vunpack.c.l.b16 %v104
      %v153 = vunpack.c.l.b16 %v105
      %v154 = vunpack.c.l.b16 %v106
      %v155 = vunpack.c.l.b16 %v107
      %v156 = vunpack.c.l.b16 %v108
      %v157 = vunpack.c.l.b16 %v109
      %v158 = vunpack.c.l.b16 %v110
      %v159 = vunpack.c.l.b16 %v111
      %v160 = vunpack.c.l.b16 %v112
      %v161 = vunpack.c.l.b16 %v113
      %v162 = vunpack.c.l.b16 %v114
      %v163 = vunpack.c.l.b16 %v115
      %v164 = vunpack.c.l.b16 %v116
      %v165 = vunpack.c.l.b16 %v117
      %v166 = vunpack.c.l.b16 %v118
      %v167 = vpack.c.b16 %v152, %v151
      %v168 = vpack.c.b16 %v154, %v153
      %v169 = vpack.c.b16 %v156, %v155
      %v170 = vpack.c.b16 %v158, %v157
      %v171 = vpack.c.b16 %v160, %v159
      %v172 = vpack.c.b16 %v162, %v161
      %v173 = vpack.c.b16 %v164, %v163
      %v174 = vpack.c.b16 %v166, %v165
      %v199 = vunpack.c.l.b16 %v119
      %v200 = vunpack.c.l.b16 %v120
      %v201 = vunpack.c.l.b16 %v121
      %v202 = vunpack.c.l.b16 %v122
      %v203 = vunpack.c.l.b16 %v123
      %v204 = vunpack.c.l.b16 %v124
      %v205 = vunpack.c.l.b16 %v125
      %v206 = vunpack.c.l.b16 %v126
      %v207 = vunpack.c.l.b16 %v127
      %v208 = vunpack.c.l.b16 %v128
      %v209 = vunpack.c.l.b16 %v129
      %v210 = vunpack.c.l.b16 %v130
      %v211 = vunpack.c.l.b16 %v131
      %v212 = vunpack.c.l.b16 %v132
      %v213 = vunpack.c.l.b16 %v133
      %v214 = vunpack.c.l.b16 %v134
      %v215 = vpack.c.b16 %v200, %v199
      %v216 = vpack.c.b16 %v202, %v201
      %v217 = vpack.c.b16 %v204, %v203
      %v218 = vpack.c.b16 %v206, %v205
      %v219 = vpack.c.b16 %v208, %v207
      %v220 = vpack.c.b16 %v210, %v209
      %v221 = vpack.c.b16 %v212, %v211
      %v222 = vpack.c.b16 %v214, %v213
      %231 = vmatprep.subr.bf16.mxu0 0
      %232 = vmatpush1.bf16.msra.mxu0 %v215
      %233 = vmatprep.subr.bf16.mxu0 0
      %234 = vmatpush1.bf16.msra.mxu0 %v216
      %235 = vmatprep.subr.bf16.mxu0 0
      %236 = vmatpush1.bf16.msra.mxu0 %v217
      %237 = vmatprep.subr.bf16.mxu0 0
      %238 = vmatpush1.bf16.msra.mxu0 %v218
      %239 = vmatprep.subr.bf16.mxu0 0
      %240 = vmatpush1.bf16.msra.mxu0 %v219
      %241 = vmatprep.subr.bf16.mxu0 0
      %242 = vmatpush1.bf16.msra.mxu0 %v220
      %243 = vmatprep.subr.bf16.mxu0 0
      %244 = vmatpush1.bf16.msra.mxu0 %v221
      %245 = vmatprep.subr.bf16.mxu0 0
      %246 = vmatpush1.bf16.msra.mxu0 %v222
      %247 = vmatprep.subr.bf16.mxu0 0
      %248 = vmatpush1.bf16.msra.mxu0 0
      %249 = vmatprep.subr.bf16.mxu0 0
      %250 = vmatpush1.bf16.msra.mxu0 0
      %251 = vmatprep.subr.bf16.mxu0 0
      %252 = vmatpush1.bf16.msra.mxu0 0
      %253 = vmatprep.subr.bf16.mxu0 0
      %254 = vmatpush1.bf16.msra.mxu0 0
      %255 = vmatprep.subr.bf16.mxu0 0
      %256 = vmatpush1.bf16.msra.mxu0 0
      %257 = vmatprep.subr.bf16.mxu0 0
      %258 = vmatpush1.bf16.msra.mxu0 0
      %259 = vmatprep.subr.bf16.mxu0 0
      %260 = vmatpush1.bf16.msra.mxu0 0
      %261 = vmatprep.subr.bf16.mxu0 0
      %262 = vmatpush1.bf16.msra.mxu0 0
      %263 = vmatprep.mubr.bf16.mxu0 0
      %264 = vmatmul.mubr.bf16.gmra.mrb[0].mxu0 %v167
      %v265 = vpop.f32.mrb[0].mxu0
      %v266 = vadd.f32 0.0, %v265
      %v267 = vpop.f32.mrb[0].mxu0
      %v268 = vpop.f32.mrb[0].mxu0
      %v269 = vadd.f32 0.0, %v268
      %v270 = vpop.f32.mrb[0].mxu0
      %271 = vmatprep.mubr.bf16.mxu0 0
      %272 = vmatmul.mubr.bf16.gmra.mrb[0].mxu0 %v168
      %v273 = vpop.f32.mrb[0].mxu0
      %v274 = vadd.f32 0.0, %v273
      %v275 = vpop.f32.mrb[0].mxu0
      %v276 = vpop.f32.mrb[0].mxu0
      %v277 = vadd.f32 0.0, %v276
      %v278 = vpop.f32.mrb[0].mxu0
      %279 = vmatprep.mubr.bf16.mxu0 0
      %280 = vmatmul.mubr.bf16.gmra.mrb[0].mxu0 %v169
      %v281 = vpop.f32.mrb[0].mxu0
      %v282 = vadd.f32 0.0, %v281
      %v283 = vpop.f32.mrb[0].mxu0
      %v284 = vpop.f32.mrb[0].mxu0
      %v285 = vadd.f32 0.0, %v284
      %v286 = vpop.f32.mrb[0].mxu0
      %287 = vmatprep.mubr.bf16.mxu0 0
      %288 = vmatmul.mubr.bf16.gmra.mrb[0].mxu0 %v170
      %v289 = vpop.f32.mrb[0].mxu0
      %v290 = vadd.f32 0.0, %v289
      %v291 = vpop.f32.mrb[0].mxu0
      %v292 = vpop.f32.mrb[0].mxu0
      %v293 = vadd.f32 0.0, %v292
      %v294 = vpop.f32.mrb[0].mxu0
      %295 = vmatprep.mubr.bf16.mxu0 0
      %296 = vmatmul.mubr.bf16.gmra.mrb[0].mxu0 %v171
      %v297 = vpop.f32.mrb[0].mxu0
      %v298 = vadd.f32 0.0, %v297
      %v299 = vpop.f32.mrb[0].mxu0
      %v300 = vpop.f32.mrb[0].mxu0
      %v301 = vadd.f32 0.0, %v300
      %v302 = vpop.f32.mrb[0].mxu0
      %303 = vmatprep.mubr.bf16.mxu0 0
      %304 = vmatmul.mubr.bf16.gmra.mrb[0].mxu0 %v172
      %v305 = vpop.f32.mrb[0].mxu0
      %v306 = vadd.f32 0.0, %v305
      %v307 = vpop.f32.mrb[0].mxu0
      %v308 = vpop.f32.mrb[0].mxu0
      %v309 = vadd.f32 0.0, %v308
      %v310 = vpop.f32.mrb[0].mxu0
      %311 = vmatprep.mubr.bf16.mxu0 0
      %312 = vmatmul.mubr.bf16.gmra.mrb[0].mxu0 %v173
      %v313 = vpop.f32.mrb[0].mxu0
      %v314 = vadd.f32 0.0, %v313
      %v315 = vpop.f32.mrb[0].mxu0
      %v316 = vpop.f32.mrb[0].mxu0
      %v317 = vadd.f32 0.0, %v316
      %v318 = vpop.f32.mrb[0].mxu0
      %319 = vmatprep.mubr.bf16.mxu0 0
      %320 = vmatmul.mubr.bf16.gmra.mrb[0].mxu0 %v174
      %v321 = vpop.f32.mrb[0].mxu0
      %v322 = vadd.f32 0.0, %v321
      %v323 = vpop.f32.mrb[0].mxu0
      %v324 = vpop.f32.mrb[0].mxu0
      %v325 = vadd.f32 0.0, %v324
      %v326 = vpop.f32.mrb[0].mxu0
      %327 = vdwg.mxu0
      %v328 = vpack.c.bf16 %v269, %v266
      %v329 = vpack.c.bf16 %v277, %v274
      %v330 = vpack.c.bf16 %v285, %v282
      %v331 = vpack.c.bf16 %v293, %v290
      %v332 = vpack.c.bf16 %v301, %v298
      %v333 = vpack.c.bf16 %v309, %v306
      %v334 = vpack.c.bf16 %v317, %v314
      %v335 = vpack.c.bf16 %v325, %v322
      %v336 = vld [vmem:[#allocation2] sm:$0xff]
      %v337 = vld [vmem:[#allocation2 + $0x8] sm:$0xff]
      %v338 = vld [vmem:[#allocation2 + $0x10] sm:$0xff]
      %v339 = vld [vmem:[#allocation2 + $0x18] sm:$0xff]
      %v340 = vld [vmem:[#allocation2 + $0x20] sm:$0xff]
      %v341 = vld [vmem:[#allocation2 + $0x28] sm:$0xff]
      %v342 = vld [vmem:[#allocation2 + $0x30] sm:$0xff]
      %v343 = vld [vmem:[#allocation2 + $0x38] sm:$0xff]
      %v344 = vld [vmem:[#allocation2 + $0x40] sm:$0xff]
      %v345 = vld [vmem:[#allocation2 + $0x48] sm:$0xff]
      %v346 = vld [vmem:[#allocation2 + $0x50] sm:$0xff]
      %v347 = vld [vmem:[#allocation2 + $0x58] sm:$0xff]
      %v348 = vld [vmem:[#allocation2 + $0x60] sm:$0xff]
      %v349 = vld [vmem:[#allocation2 + $0x68] sm:$0xff]
      %v350 = vld [vmem:[#allocation2 + $0x70] sm:$0xff]
      %v351 = vld [vmem:[#allocation2 + $0x78] sm:$0xff]
      %v352 = vld [vmem:[#allocation6] sm:$0xf]
      %v353 = vld [vmem:[#allocation6 + $0x4] sm:$0xf]
      %v354 = vld [vmem:[#allocation6 + $0x8] sm:$0xf]
      %v355 = vld [vmem:[#allocation6 + $0xc] sm:$0xf]
      %v356 = vld [vmem:[#allocation6 + $0x10] sm:$0xf]
      %v357 = vld [vmem:[#allocation6 + $0x14] sm:$0xf]
      %v358 = vld [vmem:[#allocation6 + $0x18] sm:$0xf]
      %v359 = vld [vmem:[#allocation6 + $0x1c] sm:$0xf]
      %v360 = vld [vmem:[#allocation6 + $0x20] sm:$0xf]
      %v361 = vld [vmem:[#allocation6 + $0x24] sm:$0xf]
      %v362 = vld [vmem:[#allocation6 + $0x28] sm:$0xf]
      %v363 = vld [vmem:[#allocation6 + $0x2c] sm:$0xf]
      %v364 = vld [vmem:[#allocation6 + $0x30] sm:$0xf]
      %v365 = vld [vmem:[#allocation6 + $0x34] sm:$0xf]
      %v366 = vld [vmem:[#allocation6 + $0x38] sm:$0xf]
      %v367 = vld [vmem:[#allocation6 + $0x3c] sm:$0xf]
      %v384 = vunpack.c.l.b16 %v352
      %v385 = vunpack.c.l.b16 %v353
      %v386 = vunpack.c.l.b16 %v354
      %v387 = vunpack.c.l.b16 %v355
      %v388 = vunpack.c.l.b16 %v356
      %v389 = vunpack.c.l.b16 %v357
      %v390 = vunpack.c.l.b16 %v358
      %v391 = vunpack.c.l.b16 %v359
      %v392 = vunpack.c.l.b16 %v360
      %v393 = vunpack.c.l.b16 %v361
      %v394 = vunpack.c.l.b16 %v362
      %v395 = vunpack.c.l.b16 %v363
      %v396 = vunpack.c.l.b16 %v364
      %v397 = vunpack.c.l.b16 %v365
      %v398 = vunpack.c.l.b16 %v366
      %v399 = vunpack.c.l.b16 %v367
      %v400 = vpack.c.b16 %v385, %v384
      %v401 = vpack.c.b16 %v387, %v386
      %v402 = vpack.c.b16 %v389, %v388
      %v403 = vpack.c.b16 %v391, %v390
      %v404 = vpack.c.b16 %v393, %v392
      %v405 = vpack.c.b16 %v395, %v394
      %v406 = vpack.c.b16 %v397, %v396
      %v407 = vpack.c.b16 %v399, %v398
      %416 = vmatprep.subr.bf16.mxu0 0
      %417 = vmatpush1.bf16.msra.mxu0 %v328
      %418 = vmatprep.subr.bf16.mxu0 0
      %419 = vmatpush1.bf16.msra.mxu0 %v329
      %420 = vmatprep.subr.bf16.mxu0 0
      %421 = vmatpush1.bf16.msra.mxu0 %v330
      %422 = vmatprep.subr.bf16.mxu0 0
      %423 = vmatpush1.bf16.msra.mxu0 %v331
      %424 = vmatprep.subr.bf16.mxu0 0
      %425 = vmatpush1.bf16.msra.mxu0 %v332
      %426 = vmatprep.subr.bf16.mxu0 0
      %427 = vmatpush1.bf16.msra.mxu0 %v333
      %428 = vmatprep.subr.bf16.mxu0 0
      %429 = vmatpush1.bf16.msra.mxu0 %v334
      %430 = vmatprep.subr.bf16.mxu0 0
      %431 = vmatpush1.bf16.msra.mxu0 %v335
      %432 = vmatprep.subr.bf16.mxu0 0
      %433 = vmatpush1.bf16.msra.mxu0 0
      %434 = vmatprep.subr.bf16.mxu0 0
      %435 = vmatpush1.bf16.msra.mxu0 0
      %436 = vmatprep.subr.bf16.mxu0 0
      %437 = vmatpush1.bf16.msra.mxu0 0
      %438 = vmatprep.subr.bf16.mxu0 0
      %439 = vmatpush1.bf16.msra.mxu0 0
      %440 = vmatprep.subr.bf16.mxu0 0
      %441 = vmatpush1.bf16.msra.mxu0 0
      %442 = vmatprep.subr.bf16.mxu0 0
      %443 = vmatpush1.bf16.msra.mxu0 0
      %444 = vmatprep.subr.bf16.mxu0 0
      %445 = vmatpush1.bf16.msra.mxu0 0
      %446 = vmatprep.subr.bf16.mxu0 0
      %447 = vmatpush1.bf16.msra.mxu0 0
      %448 = vmatprep.mubr.bf16.mxu0 0
      %449 = vmatmul.mubr.bf16.gmra.mrb[0].mxu0 %v400
      %v450 = vpop.f32.mrb[0].mxu0
      %v451 = vadd.f32 0.0, %v450
      %v452 = vpop.f32.mrb[0].mxu0
      %v453 = vpop.f32.mrb[0].mxu0
      %v454 = vadd.f32 0.0, %v453
      %v455 = vpop.f32.mrb[0].mxu0
      %456 = vmatprep.mubr.bf16.mxu0 0
      %457 = vmatmul.mubr.bf16.gmra.mrb[0].mxu0 %v401
      %v458 = vpop.f32.mrb[0].mxu0
      %v459 = vadd.f32 0.0, %v458
      %v460 = vpop.f32.mrb[0].mxu0
      %v461 = vpop.f32.mrb[0].mxu0
      %v462 = vadd.f32 0.0, %v461
      %v463 = vpop.f32.mrb[0].mxu0
      %464 = vmatprep.mubr.bf16.mxu0 0
      %465 = vmatmul.mubr.bf16.gmra.mrb[0].mxu0 %v402
      %v466 = vpop.f32.mrb[0].mxu0
      %v467 = vadd.f32 0.0, %v466
      %v468 = vpop.f32.mrb[0].mxu0
      %v469 = vpop.f32.mrb[0].mxu0
      %v470 = vadd.f32 0.0, %v469
      %v471 = vpop.f32.mrb[0].mxu0
      %472 = vmatprep.mubr.bf16.mxu0 0
      %473 = vmatmul.mubr.bf16.gmra.mrb[0].mxu0 %v403
      %v474 = vpop.f32.mrb[0].mxu0
      %v475 = vadd.f32 0.0, %v474
      %v476 = vpop.f32.mrb[0].mxu0
      %v477 = vpop.f32.mrb[0].mxu0
      %v478 = vadd.f32 0.0, %v477
      %v479 = vpop.f32.mrb[0].mxu0
      %480 = vmatprep.mubr.bf16.mxu0 0
      %481 = vmatmul.mubr.bf16.gmra.mrb[0].mxu0 %v404
      %v482 = vpop.f32.mrb[0].mxu0
      %v483 = vadd.f32 0.0, %v482
      %v484 = vpop.f32.mrb[0].mxu0
      %v485 = vpop.f32.mrb[0].mxu0
      %v486 = vadd.f32 0.0, %v485
      %v487 = vpop.f32.mrb[0].mxu0
      %488 = vmatprep.mubr.bf16.mxu0 0
      %489 = vmatmul.mubr.bf16.gmra.mrb[0].mxu0 %v405
      %v490 = vpop.f32.mrb[0].mxu0
      %v491 = vadd.f32 0.0, %v490
      %v492 = vpop.f32.mrb[0].mxu0
      %v493 = vpop.f32.mrb[0].mxu0
      %v494 = vadd.f32 0.0, %v493
      %v495 = vpop.f32.mrb[0].mxu0
      %496 = vmatprep.mubr.bf16.mxu0 0
      %497 = vmatmul.mubr.bf16.gmra.mrb[0].mxu0 %v406
      %v498 = vpop.f32.mrb[0].mxu0
      %v499 = vadd.f32 0.0, %v498
      %v500 = vpop.f32.mrb[0].mxu0
      %v501 = vpop.f32.mrb[0].mxu0
      %v502 = vadd.f32 0.0, %v501
      %v503 = vpop.f32.mrb[0].mxu0
      %504 = vmatprep.mubr.bf16.mxu0 0
      %505 = vmatmul.mubr.bf16.gmra.mrb[0].mxu0 %v407
      %v506 = vpop.f32.mrb[0].mxu0
      %v507 = vadd.f32 0.0, %v506
      %v508 = vpop.f32.mrb[0].mxu0
      %v509 = vpop.f32.mrb[0].mxu0
      %v510 = vadd.f32 0.0, %v509
      %v511 = vpop.f32.mrb[0].mxu0
      %512 = vdwg.mxu0
      %v513 = vadd.f32 %v336, %v451
      %v514 = vadd.f32 %v337, %v454
      %v515 = vadd.f32 %v338, %v459
      %v516 = vadd.f32 %v339, %v462
      %v517 = vadd.f32 %v340, %v467
      %v518 = vadd.f32 %v341, %v470
      %v519 = vadd.f32 %v342, %v475
      %v520 = vadd.f32 %v343, %v478
      %v521 = vadd.f32 %v344, %v483
      %v522 = vadd.f32 %v345, %v486
      %v523 = vadd.f32 %v346, %v491
      %v524 = vadd.f32 %v347, %v494
      %v525 = vadd.f32 %v348, %v499
      %v526 = vadd.f32 %v349, %v502
      %v527 = vadd.f32 %v350, %v507
      %v528 = vadd.f32 %v351, %v510
      %529 = vst [vmem:[#allocation2] sm:$0xff] %v513
      %530 = vst [vmem:[#allocation2 + $0x8] sm:$0xff] %v514
      %531 = vst [vmem:[#allocation2 + $0x10] sm:$0xff] %v515
      %532 = vst [vmem:[#allocation2 + $0x18] sm:$0xff] %v516
      %533 = vst [vmem:[#allocation2 + $0x20] sm:$0xff] %v517
      %534 = vst [vmem:[#allocation2 + $0x28] sm:$0xff] %v518
      %535 = vst [vmem:[#allocation2 + $0x30] sm:$0xff] %v519
      %536 = vst [vmem:[#allocation2 + $0x38] sm:$0xff] %v520
      %537 = vst [vmem:[#allocation2 + $0x40] sm:$0xff] %v521
      %538 = vst [vmem:[#allocation2 + $0x48] sm:$0xff] %v522
      %539 = vst [vmem:[#allocation2 + $0x50] sm:$0xff] %v523
      %540 = vst [vmem:[#allocation2 + $0x58] sm:$0xff] %v524
      %541 = vst [vmem:[#allocation2 + $0x60] sm:$0xff] %v525
      %542 = vst [vmem:[#allocation2 + $0x68] sm:$0xff] %v526
      %543 = vst [vmem:[#allocation2 + $0x70] sm:$0xff] %v527
      %544 = vst [vmem:[#allocation2 + $0x78] sm:$0xff] %v528
    $region37: #{tpu_custom_call.1} parent=1 // pred_fallthru
      _
    // Predicated region
    $region38: #{tpu_custom_call.1} parent=1 // pred_check
      %p545 = pneg %p78
    $region39: #{tpu_custom_call.1} parent=1 // pred_check_branch
      %547 = sbr.rel (%p545) target = $region41
    $region40: #{tpu_custom_call.1} parent=1 // pred_region
      %v548 = vld [vmem:[#allocation2] sm:$0xff]
      %v549 = vld [vmem:[#allocation2 + $0x8] sm:$0xff]
      %v550 = vld [vmem:[#allocation2 + $0x10] sm:$0xff]
      %v551 = vld [vmem:[#allocation2 + $0x18] sm:$0xff]
      %v552 = vld [vmem:[#allocation2 + $0x20] sm:$0xff]
      %v553 = vld [vmem:[#allocation2 + $0x28] sm:$0xff]
      %v554 = vld [vmem:[#allocation2 + $0x30] sm:$0xff]
      %v555 = vld [vmem:[#allocation2 + $0x38] sm:$0xff]
      %v556 = vld [vmem:[#allocation2 + $0x40] sm:$0xff]
      %v557 = vld [vmem:[#allocation2 + $0x48] sm:$0xff]
      %v558 = vld [vmem:[#allocation2 + $0x50] sm:$0xff]
      %v559 = vld [vmem:[#allocation2 + $0x58] sm:$0xff]
      %v560 = vld [vmem:[#allocation2 + $0x60] sm:$0xff]
      %v561 = vld [vmem:[#allocation2 + $0x68] sm:$0xff]
      %v562 = vld [vmem:[#allocation2 + $0x70] sm:$0xff]
      %v563 = vld [vmem:[#allocation2 + $0x78] sm:$0xff]
      %v564 = vld [vmem:[%s5] sm:$0x1]
      %v566 = vlaneseq
      %v567 = vshrl.u32 %v566, 7
      %v568 = vsub.s32 0, %v567
      %v569 = vrot.slane %v564, %v568
      %v571 = vadd.f32 %v548, %v569
      %v572 = vadd.f32 %v549, %v569
      %v573 = vadd.f32 %v550, %v569
      %v574 = vadd.f32 %v551, %v569
      %v575 = vadd.f32 %v552, %v569
      %v576 = vadd.f32 %v553, %v569
      %v577 = vadd.f32 %v554, %v569
      %v578 = vadd.f32 %v555, %v569
      %v579 = vadd.f32 %v556, %v569
      %v580 = vadd.f32 %v557, %v569
      %v581 = vadd.f32 %v558, %v569
      %v582 = vadd.f32 %v559, %v569
      %v583 = vadd.f32 %v560, %v569
      %v584 = vadd.f32 %v561, %v569
      %v585 = vadd.f32 %v562, %v569
      %v586 = vadd.f32 %v563, %v569
      %v587 = vmax.f32 %v571, 0.0
      %v588 = vmax.f32 %v572, 0.0
      %v589 = vmax.f32 %v573, 0.0
      %v590 = vmax.f32 %v574, 0.0
      %v591 = vmax.f32 %v575, 0.0
      %v592 = vmax.f32 %v576, 0.0
      %v593 = vmax.f32 %v577, 0.0
      %v594 = vmax.f32 %v578, 0.0
      %v595 = vmax.f32 %v579, 0.0
      %v596 = vmax.f32 %v580, 0.0
      %v597 = vmax.f32 %v581, 0.0
      %v598 = vmax.f32 %v582, 0.0
      %v599 = vmax.f32 %v583, 0.0
      %v600 = vmax.f32 %v584, 0.0
      %v601 = vmax.f32 %v585, 0.0
      %v602 = vmax.f32 %v586, 0.0
      %v603 = vpack.c.bf16 %v588, %v587
      %v604 = vpack.c.bf16 %v590, %v589
      %v605 = vpack.c.bf16 %v592, %v591
      %v606 = vpack.c.bf16 %v594, %v593
      %v607 = vpack.c.bf16 %v596, %v595
      %v608 = vpack.c.bf16 %v598, %v597
      %v609 = vpack.c.bf16 %v600, %v599
      %v610 = vpack.c.bf16 %v602, %v601
      %v619 = vunpack.c.l.b16 %v603
      %v620 = vunpack.c.h.b16 %v603
      %v621 = vunpack.c.l.b16 %v604
      %v622 = vunpack.c.h.b16 %v604
      %v623 = vunpack.c.l.b16 %v605
      %v624 = vunpack.c.h.b16 %v605
      %v625 = vunpack.c.l.b16 %v606
      %v626 = vunpack.c.h.b16 %v606
      %v627 = vunpack.c.l.b16 %v607
      %v628 = vunpack.c.h.b16 %v607
      %v629 = vunpack.c.l.b16 %v608
      %v630 = vunpack.c.h.b16 %v608
      %v631 = vunpack.c.l.b16 %v609
      %v632 = vunpack.c.h.b16 %v609
      %v633 = vunpack.c.l.b16 %v610
      %v634 = vunpack.c.h.b16 %v610
      %v635 = vpack.c.b16 %v619, %v619
      %v636 = vpack.c.b16 %v620, %v620
      %v637 = vpack.c.b16 %v621, %v621
      %v638 = vpack.c.b16 %v622, %v622
      %v639 = vpack.c.b16 %v623, %v623
      %v640 = vpack.c.b16 %v624, %v624
      %v641 = vpack.c.b16 %v625, %v625
      %v642 = vpack.c.b16 %v626, %v626
      %v643 = vpack.c.b16 %v627, %v627
      %v644 = vpack.c.b16 %v628, %v628
      %v645 = vpack.c.b16 %v629, %v629
      %v646 = vpack.c.b16 %v630, %v630
      %v647 = vpack.c.b16 %v631, %v631
      %v648 = vpack.c.b16 %v632, %v632
      %v649 = vpack.c.b16 %v633, %v633
      %v650 = vpack.c.b16 %v634, %v634
      %667 = vst [vmem:[#allocation12] sm:$0xf] %v635
      %668 = vst [vmem:[#allocation12 + $0x4] sm:$0xf] %v636
      %669 = vst [vmem:[#allocation12 + $0x8] sm:$0xf] %v637
      %670 = vst [vmem:[#allocation12 + $0xc] sm:$0xf] %v638
      %671 = vst [vmem:[#allocation12 + $0x10] sm:$0xf] %v639
      %672 = vst [vmem:[#allocation12 + $0x14] sm:$0xf] %v640
      %673 = vst [vmem:[#allocation12 + $0x18] sm:$0xf] %v641
      %674 = vst [vmem:[#allocation12 + $0x1c] sm:$0xf] %v642
      %675 = vst [vmem:[#allocation12 + $0x20] sm:$0xf] %v643
      %676 = vst [vmem:[#allocation12 + $0x24] sm:$0xf] %v644
      %677 = vst [vmem:[#allocation12 + $0x28] sm:$0xf] %v645
      %678 = vst [vmem:[#allocation12 + $0x2c] sm:$0xf] %v646
      %679 = vst [vmem:[#allocation12 + $0x30] sm:$0xf] %v647
      %680 = vst [vmem:[#allocation12 + $0x34] sm:$0xf] %v648
      %681 = vst [vmem:[#allocation12 + $0x38] sm:$0xf] %v649
      %682 = vst [vmem:[#allocation12 + $0x3c] sm:$0xf] %v650
    $region41: #{tpu_custom_call.1} parent=1 // pred_fallthru
      _
    // Predicated region
    $region42: #{tpu_custom_call.1} parent=1 // pred_check
      _
    $region43: #{tpu_custom_call.1} parent=1 // pred_check_branch
      %684 = sbr.rel (0) target = $region45
    $region44: #{tpu_custom_call.1} parent=1 // pred_region
      %s686 = ssub.s32 1024, 1024
      %687 = vsyncadd [#allocation8], %s686
      %s688 = sshll.u32 [#allocation12], 4
      %s689 = int_to_ptr.vmem [resolvable:$true] %s688
      %694 = dma.vmem_to_hbm [thread:$0]  %s689, 1024, %s6, [#allocation8], 64, 64, 4
    $region45: #{tpu_custom_call.1} parent=1 // pred_fallthru
      _
    // Predicated region
    $region46: #{tpu_custom_call.1} parent=1 // pred_check
      _
    $region47: #{tpu_custom_call.1} parent=1 // pred_check_branch
      %696 = sbr.rel (0) target = $region49
    $region48: #{tpu_custom_call.1} parent=1 // pred_region
      %697 = dma.done [#allocation8], 1024
    $region49: #{tpu_custom_call.1} parent=1 // pred_fallthru
      _
    %698 = vsyncpa [#allocation7], 1
    %699 = vsyncpa [#allocation10], 1
    %700 = vsyncpa [#allocation8], 1

</llo_original>
